<compile_context>
chip_gen: v7x
topology: tpu7x:2x2x1
jax: 0.10.0
libtpu: 0.0.40
codegen_flags: <defaults>
</compile_context>

<pallas_src>
import functools

import jax
import jax.numpy as jnp
import numpy as np
from jax.experimental import pallas as pl
from jax.experimental.pallas import tpu as pltpu

ACTION_DIM = 4
STATE_DIM = 6 + 4 * 20 + 2          # = 88 (PyTorch spec)
HIDDEN_DIM = 256

OUT_PAD = 128                        # lane-dense output head (>= ACTION_DIM)
TB_CAP = 1024                        # max batch rows per grid step


def _round_up(x, m):
    return ((x + m - 1) // m) * m


def _choose_tiling(B):
    """Pick (TB, n_tiles, B_pad): big tiles, low padding waste, even tile count
    when the batch is split (so v7x's two TensorCores stay balanced)."""
    n = max(1, -(-B // TB_CAP))              # ceil(B / TB_CAP)
    if B > TB_CAP and n % 2 == 1:
        n += 1                               # even tile count for 2-TC megacore
    TB = _round_up(-(-B // n), 8)            # ceil(B / n) rounded to 8 sublanes
    B_pad = TB * n
    return TB, n, B_pad


def actor_kernel(x_ref, w1_ref, b1_ref, w2_ref, b2_ref, w3_ref, b3_ref, o_ref):
    # Whole MLP fused: no intermediate ever touches HBM. Matmuls are bf16 x bf16
    # with f32 MXU accumulation; bias add / ReLU / tanh stay in f32.
    x = x_ref[...]                                                          # [TB, 88] bf16
    h1 = jnp.dot(x, w1_ref[...], preferred_element_type=jnp.float32) + b1_ref[...]
    h1 = jnp.maximum(h1, 0.0)                                               # ReLU
    h2 = jnp.dot(h1.astype(jnp.bfloat16), w2_ref[...],
                 preferred_element_type=jnp.float32) + b2_ref[...]
    h2 = jnp.maximum(h2, 0.0)                                               # ReLU
    mu = jnp.dot(h2.astype(jnp.bfloat16), w3_ref[...],
                 preferred_element_type=jnp.float32) + b3_ref[...]          # [TB, 128]
    o_ref[...] = jnp.tanh(mu)                                               # Tanh head


@jax.jit
def ddpg_actor_forward(state, params):
    """state: [B, STATE_DIM] f32; params: bf16 weights ([in, out]), f32 biases."""
    B = state.shape[0]
    TB, n_tiles, B_pad = _choose_tiling(B)

    # bf16 activations across the kernel boundary; pad only the batch rows (cheap,
    # fused under jit) -- no 128-lane feature pad / HBM slab round-trip anymore.
    x = state.astype(jnp.bfloat16)
    if B_pad != B:
        x = jnp.pad(x, ((0, B_pad - B), (0, 0)))

    act_spec_in = pl.BlockSpec((TB, STATE_DIM), lambda i: (i, 0))
    act_spec_out = pl.BlockSpec((TB, OUT_PAD), lambda i: (i, 0))
    # Constant index_maps + single buffering: weights/biases are DMA'd once and stay
    # VMEM-resident for every grid step (no second copy / prefetch slot).
    w_spec = lambda r, c: pl.BlockSpec((r, c), lambda i: (0, 0),
                                       pipeline_mode=pl.Buffered(1))

    weight_bytes = (STATE_DIM * HIDDEN_DIM + HIDDEN_DIM * HIDDEN_DIM
                    + HIDDEN_DIM * OUT_PAD) * 2                       # bf16
    bias_bytes = (HIDDEN_DIM + HIDDEN_DIM + OUT_PAD) * 4              # f32
    act_bytes = B_pad * STATE_DIM * 2 + B_pad * OUT_PAD * 4           # bf16 in, f32 out
    cost = pl.CostEstimate(
        flops=2 * B_pad * (STATE_DIM * HIDDEN_DIM + HIDDEN_DIM * HIDDEN_DIM
                           + HIDDEN_DIM * OUT_PAD),
        transcendentals=B_pad * OUT_PAD,
        bytes_accessed=weight_bytes + bias_bytes + act_bytes,
    )

    out = pl.pallas_call(
        actor_kernel,
        out_shape=jax.ShapeDtypeStruct((B_pad, OUT_PAD), jnp.float32),
        grid=(n_tiles,),
        in_specs=[
            act_spec_in,
            w_spec(STATE_DIM, HIDDEN_DIM), w_spec(1, HIDDEN_DIM),
            w_spec(HIDDEN_DIM, HIDDEN_DIM), w_spec(1, HIDDEN_DIM),
            w_spec(HIDDEN_DIM, OUT_PAD), w_spec(1, OUT_PAD),
        ],
        out_specs=act_spec_out,
        compiler_params=pltpu.CompilerParams(
            dimension_semantics=("parallel",)),   # batch tiles split across TCs on v7x
        cost_estimate=cost,
    )(
        x,
        params["w1"], params["b1"],
        params["w2"], params["b2"],
        params["w3"], params["b3"],
    )
    # Slice off batch padding and the zero-padded action lanes.
    return out[:B, :ACTION_DIM]


def init_params(key):
    """nn.Linear-style init U(-1/sqrt(fan_in), 1/sqrt(fan_in)).
    Weights stored [in, out] (pre-transposed); only the output head is padded to a
    lane-dense 128 columns. Weights cast to bf16 for the MXU; biases stay f32."""
    def linear(key, fan_in, fan_out, pad_in, pad_out):
        kw, kb = jax.random.split(key)
        bound = 1.0 / np.sqrt(fan_in)
        w = jax.random.uniform(kw, (fan_in, fan_out), jnp.float32, -bound, bound)
        b = jax.random.uniform(kb, (1, fan_out), jnp.float32, -bound, bound)
        w_p = jnp.zeros((pad_in, pad_out), jnp.float32).at[:fan_in, :fan_out].set(w)
        b_p = jnp.zeros((1, pad_out), jnp.float32).at[:, :fan_out].set(b)
        return w_p.astype(jnp.bfloat16), b_p

    k1, k2, k3 = jax.random.split(key, 3)
    w1, b1 = linear(k1, STATE_DIM, HIDDEN_DIM, STATE_DIM, HIDDEN_DIM)   # no K padding
    w2, b2 = linear(k2, HIDDEN_DIM, HIDDEN_DIM, HIDDEN_DIM, HIDDEN_DIM)
    w3, b3 = linear(k3, HIDDEN_DIM, ACTION_DIM, HIDDEN_DIM, OUT_PAD)
    return dict(w1=w1, b1=b1, w2=w2, b2=b2, w3=w3, b3=b3)


def reference_forward(state, p):
    """Same math (bf16 matmul inputs, f32 accumulate / elementwise) in plain JAX."""
    x = state.astype(jnp.bfloat16)
    h1 = jnp.maximum(
        jnp.dot(x, p["w1"], preferred_element_type=jnp.float32) + p["b1"], 0.0)
    h2 = jnp.maximum(
        jnp.dot(h1.astype(jnp.bfloat16), p["w2"],
                preferred_element_type=jnp.float32) + p["b2"], 0.0)
    mu = jnp.dot(h2.astype(jnp.bfloat16), p["w3"],
                 preferred_element_type=jnp.float32) + p["b3"]
    return jnp.tanh(mu)[:, :ACTION_DIM]


if __name__ == "__main__":
    key = jax.random.PRNGKey(0)
    k_params, k_state = jax.random.split(key)

    params = init_params(k_params)
    batch = 8
    state = jax.random.normal(k_state, (batch, STATE_DIM), jnp.float32)

    out = ddpg_actor_forward(state, params)
    out = jax.block_until_ready(out)

    ref = reference_forward(state, params)
    np.testing.assert_allclose(np.asarray(out), np.asarray(ref), rtol=2e-3, atol=2e-3)
    assert out.shape == (batch, ACTION_DIM)
    assert bool(jnp.all(jnp.isfinite(out)))

    print("KERNEL_OK")
</pallas_src>

<mosaic_0001>
module attributes {stable_mosaic.version = 11 : i64} {
  func.func @actor_kernel(%arg0: i32, %arg1: memref<8x88xbf16, #tpu.memory_space<vmem>>, %arg2: memref<88x256xbf16, #tpu.memory_space<vmem>>, %arg3: memref<1x256xf32, #tpu.memory_space<vmem>>, %arg4: memref<256x256xbf16, #tpu.memory_space<vmem>>, %arg5: memref<1x256xf32, #tpu.memory_space<vmem>>, %arg6: memref<256x128xbf16, #tpu.memory_space<vmem>>, %arg7: memref<1x128xf32, #tpu.memory_space<vmem>>, %arg8: memref<8x128xf32, #tpu.memory_space<vmem>>) attributes {dimension_semantics = [#tpu.dimension_semantics<parallel>], iteration_bounds = array<i64: 1>, scalar_prefetch = 0 : i64, scratch_operands = 0 : i64, tpu.core_type = #tpu.core_type<tc>, window_params = [{transform_indices = @transform_0, window_bounds = array<i64: 8, 88>}, {pipeline_mode = #tpu.pipeline_mode<synchronous>, transform_indices = @transform_1, window_bounds = array<i64: 88, 256>}, {pipeline_mode = #tpu.pipeline_mode<synchronous>, transform_indices = @transform_2, window_bounds = array<i64: 1, 256>}, {pipeline_mode = #tpu.pipeline_mode<synchronous>, transform_indices = @transform_3, window_bounds = array<i64: 256, 256>}, {pipeline_mode = #tpu.pipeline_mode<synchronous>, transform_indices = @transform_4, window_bounds = array<i64: 1, 256>}, {pipeline_mode = #tpu.pipeline_mode<synchronous>, transform_indices = @transform_5, window_bounds = array<i64: 256, 128>}, {pipeline_mode = #tpu.pipeline_mode<synchronous>, transform_indices = @transform_6, window_bounds = array<i64: 1, 128>}, {transform_indices = @transform_7, window_bounds = array<i64: 8, 128>}]} {
    %c0 = arith.constant 0 : index
    %c0_0 = arith.constant 0 : index
    %0 = vector.load %arg1[%c0, %c0_0] : memref<8x88xbf16, #tpu.memory_space<vmem>>, vector<8x88xbf16>
    %c0_1 = arith.constant 0 : index
    %c0_2 = arith.constant 0 : index
    %1 = vector.load %arg2[%c0_1, %c0_2] : memref<88x256xbf16, #tpu.memory_space<vmem>>, vector<88x256xbf16>
    %cst = arith.constant dense<0.000000e+00> : vector<8x256xf32>
    %2 = tpu.matmul %0, %1, %cst {dimension_numbers = #tpu.dot_dimension_numbers<[1], [0], [0], [1], [0, 0, 1, 1], [], []>} : vector<8x88xbf16>, vector<88x256xbf16>, vector<8x256xf32> -> vector<8x256xf32>
    %c0_3 = arith.constant 0 : index
    %c0_4 = arith.constant 0 : index
    %3 = vector.load %arg3[%c0_3, %c0_4] : memref<1x256xf32, #tpu.memory_space<vmem>>, vector<1x256xf32>
    %4 = vector.broadcast %3 : vector<1x256xf32> to vector<8x256xf32>
    %5 = arith.addf %2, %4 : vector<8x256xf32>
    %cst_5 = arith.constant 0.000000e+00 : f32
    %6 = vector.broadcast %cst_5 : f32 to vector<8x256xf32>
    %7 = arith.maximumf %5, %6 : vector<8x256xf32>
    %8 = arith.truncf %7 : vector<8x256xf32> to vector<8x256xbf16>
    %c0_6 = arith.constant 0 : index
    %c0_7 = arith.constant 0 : index
    %9 = vector.load %arg4[%c0_6, %c0_7] : memref<256x256xbf16, #tpu.memory_space<vmem>>, vector<256x256xbf16>
    %cst_8 = arith.constant dense<0.000000e+00> : vector<8x256xf32>
    %10 = tpu.matmul %8, %9, %cst_8 {dimension_numbers = #tpu.dot_dimension_numbers<[1], [0], [0], [1], [0, 0, 1, 1], [], []>} : vector<8x256xbf16>, vector<256x256xbf16>, vector<8x256xf32> -> vector<8x256xf32>
    %c0_9 = arith.constant 0 : index
    %c0_10 = arith.constant 0 : index
    %11 = vector.load %arg5[%c0_9, %c0_10] : memref<1x256xf32, #tpu.memory_space<vmem>>, vector<1x256xf32>
    %12 = vector.broadcast %11 : vector<1x256xf32> to vector<8x256xf32>
    %13 = arith.addf %10, %12 : vector<8x256xf32>
    %cst_11 = arith.constant 0.000000e+00 : f32
    %14 = vector.broadcast %cst_11 : f32 to vector<8x256xf32>
    %15 = arith.maximumf %13, %14 : vector<8x256xf32>
    %16 = arith.truncf %15 : vector<8x256xf32> to vector<8x256xbf16>
    %c0_12 = arith.constant 0 : index
    %c0_13 = arith.constant 0 : index
    %17 = vector.load %arg6[%c0_12, %c0_13] : memref<256x128xbf16, #tpu.memory_space<vmem>>, vector<256x128xbf16>
    %cst_14 = arith.constant dense<0.000000e+00> : vector<8x128xf32>
    %18 = tpu.matmul %16, %17, %cst_14 {dimension_numbers = #tpu.dot_dimension_numbers<[1], [0], [0], [1], [0, 0, 1, 1], [], []>} : vector<8x256xbf16>, vector<256x128xbf16>, vector<8x128xf32> -> vector<8x128xf32>
    %c0_15 = arith.constant 0 : index
    %c0_16 = arith.constant 0 : index
    %19 = vector.load %arg7[%c0_15, %c0_16] : memref<1x128xf32, #tpu.memory_space<vmem>>, vector<1x128xf32>
    %20 = vector.broadcast %19 : vector<1x128xf32> to vector<8x128xf32>
    %21 = arith.addf %18, %20 : vector<8x128xf32>
    %22 = math.tanh %21 : vector<8x128xf32>
    %c0_17 = arith.constant 0 : index
    %c0_18 = arith.constant 0 : index
    %23 = vector.load %arg8[%c0_17, %c0_18] : memref<8x128xf32, #tpu.memory_space<vmem>>, vector<8x128xf32>
    tpu.vector_store %arg8[%c0_17, %c0_18], %22 {strides = array<i32>} : memref<8x128xf32, #tpu.memory_space<vmem>>, vector<8x128xf32>,
    return
  }
  func.func @transform_0(%arg0: i32) -> (i32, i32) {
    %c0_i32 = arith.constant 0 : i32
    %c0_i32_0 = arith.constant 0 : i32
    return %arg0, %c0_i32 : i32, i32
  }
  func.func @transform_1(%arg0: i32) -> (i32, i32) {
    %c0_i32 = arith.constant 0 : i32
    %c0_i32_0 = arith.constant 0 : i32
    %c0_i32_1 = arith.constant 0 : i32
    return %c0_i32, %c0_i32_0 : i32, i32
  }
  func.func @transform_2(%arg0: i32) -> (i32, i32) {
    %c0_i32 = arith.constant 0 : i32
    %c0_i32_0 = arith.constant 0 : i32
    %c0_i32_1 = arith.constant 0 : i32
    return %c0_i32, %c0_i32_0 : i32, i32
  }
  func.func @transform_3(%arg0: i32) -> (i32, i32) {
    %c0_i32 = arith.constant 0 : i32
    %c0_i32_0 = arith.constant 0 : i32
    %c0_i32_1 = arith.constant 0 : i32
    return %c0_i32, %c0_i32_0 : i32, i32
  }
  func.func @transform_4(%arg0: i32) -> (i32, i32) {
    %c0_i32 = arith.constant 0 : i32
    %c0_i32_0 = arith.constant 0 : i32
    %c0_i32_1 = arith.constant 0 : i32
    return %c0_i32, %c0_i32_0 : i32, i32
  }
  func.func @transform_5(%arg0: i32) -> (i32, i32) {
    %c0_i32 = arith.constant 0 : i32
    %c0_i32_0 = arith.constant 0 : i32
    %c0_i32_1 = arith.constant 0 : i32
    return %c0_i32, %c0_i32_0 : i32, i32
  }
  func.func @transform_6(%arg0: i32) -> (i32, i32) {
    %c0_i32 = arith.constant 0 : i32
    %c0_i32_0 = arith.constant 0 : i32
    %c0_i32_1 = arith.constant 0 : i32
    return %c0_i32, %c0_i32_0 : i32, i32
  }
  func.func @transform_7(%arg0: i32) -> (i32, i32) {
    %c0_i32 = arith.constant 0 : i32
    %c0_i32_0 = arith.constant 0 : i32
    return %arg0, %c0_i32 : i32, i32
  }
}

</mosaic_0001>

<llo_original>
// kernel: ddpg_actor_forward.1
$region0: #{ddpg_actor_forward.1}
  #allocation0 [shape = 'u32[]', space=smem, size = 0x4, offset = 0x4, fixed_abs, tag = 'smem constant byte address 0x4 - core index']
  #allocation1 [shape = 'u32[144,128]{1,0:T(1,128)}', space=vmem, size = 0x12000, scoped, tag = 'internal scratch']
  %s0 = inlined_call_operand.vmem [shape: bf16[8,88], index: 0, kind: input, shape index: {}]
  %s1 = inlined_call_operand.hbm [shape: bf16[88,256], index: 1, kind: input, shape index: {}]
  %s2 = inlined_call_operand.vmem [shape: f32[1,256], index: 2, kind: input, shape index: {}]
  %s3 = inlined_call_operand.hbm [shape: bf16[256,256], index: 3, kind: input, shape index: {}]
  %s4 = inlined_call_operand.vmem [shape: f32[1,256], index: 4, kind: input, shape index: {}]
  %s5 = inlined_call_operand.hbm [shape: bf16[256,128], index: 5, kind: input, shape index: {}]
  %s6 = inlined_call_operand.vmem [shape: f32[1,128], index: 6, kind: input, shape index: {}]
  %s7 = inlined_call_operand.vmem [shape: f32[8,128], index: 7, kind: output, shape index: {}]
  %s8 = sld [smem:[#allocation0]]
  $region50: #{ddpg_actor_forward.1} parent=0
    _
  %s10 = ssub.s32 1, %s8
  %s11 = scalar_select 0, %s10, %s8
  $region1: #{ddpg_actor_forward.1} parent=0
    #allocation2 [shape = 'u8[45056]{0}', space=vmem, size = 0xb000, scoped, tag = 'input window, operand 1, single buffered']
    #allocation3 [shape = 's32[1]{0}', space=sflag, size = 0x4, scoped, tag = 'scoped memory for ddpg_actor_forward.1']
    #allocation4 [shape = 'u8[131072]{0}', space=vmem, size = 0x20000, scoped, tag = 'input window, operand 3, single buffered']
    #allocation5 [shape = 's32[1]{0}', space=sflag, size = 0x4, scoped, tag = 'scoped memory for ddpg_actor_forward.1']
    #allocation6 [shape = 'u8[65536]{0}', space=vmem, size = 0x10000, scoped, tag = 'input window, operand 5, single buffered']
    %12 = vsyncpa [#allocation3], 0
    %13 = vsyncpa [#allocation5], 0
    // Predicated region
    $region2: #{ddpg_actor_forward.1} parent=1 // pred_check
      _
    $region3: #{ddpg_actor_forward.1} parent=1 // pred_check_branch
      %15 = sbr.rel (0) target = $region5
    $region4: #{ddpg_actor_forward.1} parent=1 // pred_region
      _
    $region5: #{ddpg_actor_forward.1} parent=1 // pred_fallthru
      _
    // Predicated region
    $region6: #{ddpg_actor_forward.1} parent=1 // pred_check
      _
    $region7: #{ddpg_actor_forward.1} parent=1 // pred_check_branch
      %17 = sbr.rel (0) target = $region9
    $region8: #{ddpg_actor_forward.1} parent=1 // pred_region
      %s19 = ssub.s32 1408, 1408
      %20 = vsyncadd [#allocation3], %s19
      %s21 = sshll.u32 [#allocation2], 4
      %s22 = int_to_ptr.vmem [resolvable:$true] %s21
      %27 = dma.hbm_to_vmem [thread:$0]  %s1, 1408, %s22, [#allocation3], 128, 128, 8
    $region9: #{ddpg_actor_forward.1} parent=1 // pred_fallthru
      _
    // Predicated region
    $region10: #{ddpg_actor_forward.1} parent=1 // pred_check
      _
    $region11: #{ddpg_actor_forward.1} parent=1 // pred_check_branch
      %29 = sbr.rel (0) target = $region13
    $region12: #{ddpg_actor_forward.1} parent=1 // pred_region
      _
    $region13: #{ddpg_actor_forward.1} parent=1 // pred_fallthru
      _
    // Predicated region
    $region14: #{ddpg_actor_forward.1} parent=1 // pred_check
      _
    $region15: #{ddpg_actor_forward.1} parent=1 // pred_check_branch
      %31 = sbr.rel (0) target = $region17
    $region16: #{ddpg_actor_forward.1} parent=1 // pred_region
      %s33 = ssub.s32 4096, 4096
      %34 = vsyncadd [#allocation5], %s33
      %s35 = sshll.u32 [#allocation4], 4
      %s36 = int_to_ptr.vmem [resolvable:$true] %s35
      %41 = dma.hbm_to_vmem [thread:$0]  %s3, 4096, %s36, [#allocation5], 128, 128, 8
    $region17: #{ddpg_actor_forward.1} parent=1 // pred_fallthru
      _
    // Predicated region
    $region18: #{ddpg_actor_forward.1} parent=1 // pred_check
      _
    $region19: #{ddpg_actor_forward.1} parent=1 // pred_check_branch
      %43 = sbr.rel (0) target = $region21
    $region20: #{ddpg_actor_forward.1} parent=1 // pred_region
      _
    $region21: #{ddpg_actor_forward.1} parent=1 // pred_fallthru
      _
    // Predicated region
    $region22: #{ddpg_actor_forward.1} parent=1 // pred_check
      _
    $region23: #{ddpg_actor_forward.1} parent=1 // pred_check_branch
      %45 = sbr.rel (0) target = $region25
    $region24: #{ddpg_actor_forward.1} parent=1 // pred_region
      %s47 = ssub.s32 2048, 2048
      %48 = vsyncadd [#allocation5], %s47
      %s49 = sshll.u32 [#allocation6], 4
      %s50 = int_to_ptr.vmem [resolvable:$true] %s49
      %55 = dma.hbm_to_vmem [thread:$0]  %s5, 2048, %s50, [#allocation5], 64, 64, 4
    $region25: #{ddpg_actor_forward.1} parent=1 // pred_fallthru
      _
    // Predicated region
    $region26: #{ddpg_actor_forward.1} parent=1 // pred_check
      _
    $region27: #{ddpg_actor_forward.1} parent=1 // pred_check_branch
      %57 = sbr.rel (0) target = $region29
    $region28: #{ddpg_actor_forward.1} parent=1 // pred_region
      _
    $region29: #{ddpg_actor_forward.1} parent=1 // pred_fallthru
      _
    // Predicated region
    $region30: #{ddpg_actor_forward.1} parent=1 // pred_check
      _
    $region31: #{ddpg_actor_forward.1} parent=1 // pred_check_branch
      %59 = sbr.rel (0) target = $region33
    $region32: #{ddpg_actor_forward.1} parent=1 // pred_region
      %60 = dma.done [#allocation3], 1408
    $region33: #{ddpg_actor_forward.1} parent=1 // pred_fallthru
      _
    // Predicated region
    $region34: #{ddpg_actor_forward.1} parent=1 // pred_check
      _
    $region35: #{ddpg_actor_forward.1} parent=1 // pred_check_branch
      %62 = sbr.rel (0) target = $region37
    $region36: #{ddpg_actor_forward.1} parent=1 // pred_region
      %63 = dma.done [#allocation5], 4096
    $region37: #{ddpg_actor_forward.1} parent=1 // pred_fallthru
      _
    // Predicated region
    $region38: #{ddpg_actor_forward.1} parent=1 // pred_check
      _
    $region39: #{ddpg_actor_forward.1} parent=1 // pred_check_branch
      %65 = sbr.rel (0) target = $region41
    $region40: #{ddpg_actor_forward.1} parent=1 // pred_region
      %66 = dma.done [#allocation5], 2048
    $region41: #{ddpg_actor_forward.1} parent=1 // pred_fallthru
      _
    %v68 = vld [vmem:[%s0] sm:$0xf]
    %v69 = vld [vmem:[#allocation2] sm:$0xff]
    %v70 = vld [vmem:[#allocation2 + $0x8] sm:$0xff]
    %v71 = vld [vmem:[#allocation2 + $0x10] sm:$0xff]
    %v72 = vld [vmem:[#allocation2 + $0x18] sm:$0xff]
    %v73 = vld [vmem:[#allocation2 + $0x20] sm:$0xff]
    %v74 = vld [vmem:[#allocation2 + $0x28] sm:$0xff]
    %v75 = vld [vmem:[#allocation2 + $0x30] sm:$0xff]
    %v76 = vld [vmem:[#allocation2 + $0x38] sm:$0xff]
    %v77 = vld [vmem:[#allocation2 + $0x40] sm:$0xff]
    %v78 = vld [vmem:[#allocation2 + $0x48] sm:$0xff]
    %v79 = vld [vmem:[#allocation2 + $0x50] sm:$0xff]
    %v80 = vld [vmem:[%s2] sm:$0x3]
    %v82 = vlaneseq
    %v83 = vshrl.u32 %v82, 7
    %v84 = vsub.s32 0, %v83
    %v85 = vrot.slane %v80, %v84
    %v86 = vlaneseq
    %v87 = vshrl.u32 %v86, 7
    %v88 = vsub.s32 1, %v87
    %v89 = vrot.slane %v80, %v88
    %v103 = vunpack.c.l.b16 %v69
    %v104 = vunpack.c.h.b16 %v69
    %v105 = vunpack.c.l.b16 %v70
    %v106 = vunpack.c.h.b16 %v70
    %v107 = vunpack.c.l.b16 %v71
    %v108 = vunpack.c.h.b16 %v71
    %v109 = vunpack.c.l.b16 %v72
    %v110 = vunpack.c.h.b16 %v72
    %v111 = vunpack.c.l.b16 %v73
    %v112 = vunpack.c.h.b16 %v73
    %v113 = vunpack.c.l.b16 %v74
    %v114 = vunpack.c.h.b16 %v74
    %v115 = vunpack.c.l.b16 %v75
    %v116 = vunpack.c.h.b16 %v75
    %v117 = vunpack.c.l.b16 %v76
    %v118 = vunpack.c.h.b16 %v76
    %v119 = vunpack.c.l.b16 %v77
    %v120 = vunpack.c.h.b16 %v77
    %v121 = vunpack.c.l.b16 %v78
    %v122 = vunpack.c.h.b16 %v78
    %v123 = vunpack.c.l.b16 %v79
    %v124 = vunpack.c.h.b16 %v79
    %v125 = vpack.c.b16 %v105, %v103
    %v126 = vpack.c.b16 %v106, %v104
    %v127 = vpack.c.b16 %v109, %v107
    %v128 = vpack.c.b16 %v110, %v108
    %v129 = vpack.c.b16 %v113, %v111
    %v130 = vpack.c.b16 %v114, %v112
    %v131 = vpack.c.b16 %v117, %v115
    %v132 = vpack.c.b16 %v118, %v116
    %v133 = vpack.c.b16 %v121, %v119
    %v134 = vpack.c.b16 %v122, %v120
    %v135 = vpack.c.b16 %v123, %v123
    %v136 = vpack.c.b16 %v124, %v124
    %vm147 = vcmask 719872
    %v149 = vsel %vm147, %v68, 0
    %vm151 = vcmask 1043456
    %v153 = vsel %vm151, %v135, 0
    %v156 = vsel %vm151, %v136, 0
    %158 = vmatprep.subr.bf16.mxu0 %v126
    %159 = vmatpush1.bf16.msra.mxu0 %v125
    %160 = vmatprep.subr.bf16.mxu0 %v128
    %161 = vmatpush1.bf16.msra.mxu0 %v127
    %162 = vmatprep.subr.bf16.mxu0 %v130
    %163 = vmatpush1.bf16.msra.mxu0 %v129
    %164 = vmatprep.subr.bf16.mxu0 %v132
    %165 = vmatpush1.bf16.msra.mxu0 %v131
    %166 = vmatprep.subr.bf16.mxu0 %v134
    %167 = vmatpush1.bf16.msra.mxu0 %v133
    %168 = vmatprep.subr.bf16.mxu0 %v156
    %169 = vmatpush1.bf16.msra.mxu0 %v153
    %170 = vmatprep.subr.bf16.mxu0 0
    %171 = vmatpush1.bf16.msra.mxu0 0
    %172 = vmatprep.subr.bf16.mxu0 0
    %173 = vmatpush1.bf16.msra.mxu0 0
    %174 = vmatprep.subr.bf16.mxu0 0
    %175 = vmatpush1.bf16.msra.mxu0 0
    %176 = vmatprep.subr.bf16.mxu0 0
    %177 = vmatpush1.bf16.msra.mxu0 0
    %178 = vmatprep.subr.bf16.mxu0 0
    %179 = vmatpush1.bf16.msra.mxu0 0
    %180 = vmatprep.subr.bf16.mxu0 0
    %181 = vmatpush1.bf16.msra.mxu0 0
    %182 = vmatprep.subr.bf16.mxu0 0
    %183 = vmatpush1.bf16.msra.mxu0 0
    %184 = vmatprep.subr.bf16.mxu0 0
    %185 = vmatpush1.bf16.msra.mxu0 0
    %186 = vmatprep.subr.bf16.mxu0 0
    %187 = vmatpush1.bf16.msra.mxu0 0
    %188 = vmatprep.subr.bf16.mxu0 0
    %189 = vmatpush1.bf16.msra.mxu0 0
    %190 = vmatprep.mubr.bf16.mxu0 0
    %191 = vmatmul.mubr.bf16.gmra.mrb[0].mxu0 %v149
    %v192 = vpop.f32.mrb[0].mxu0
    %v193 = vadd.f32 %v85, %v192
    %v194 = vpop.f32.mrb[0].mxu0
    %v195 = vadd.f32 %v89, %v194
    %v196 = vpop.f32.mrb[0].mxu0
    %v197 = vpop.f32.mrb[0].mxu0
    %198 = vdwg.mxu0
    %v199 = vmax.f32 %v193, 0.0
    %v200 = vmax.f32 %v195, 0.0
    %v201 = vpack.c.bf16 %v199, %v199
    %v202 = vpack.c.bf16 %v200, %v200
    %v203 = vld [vmem:[#allocation4] sm:$0xff]
    %v204 = vld [vmem:[#allocation4 + $0x8] sm:$0xff]
    %v205 = vld [vmem:[#allocation4 + $0x10] sm:$0xff]
    %v206 = vld [vmem:[#allocation4 + $0x18] sm:$0xff]
    %v207 = vld [vmem:[#allocation4 + $0x20] sm:$0xff]
    %v208 = vld [vmem:[#allocation4 + $0x28] sm:$0xff]
    %v209 = vld [vmem:[#allocation4 + $0x30] sm:$0xff]
    %v210 = vld [vmem:[#allocation4 + $0x38] sm:$0xff]
    %v211 = vld [vmem:[#allocation4 + $0x40] sm:$0xff]
    %v212 = vld [vmem:[#allocation4 + $0x48] sm:$0xff]
    %v213 = vld [vmem:[#allocation4 + $0x50] sm:$0xff]
    %v214 = vld [vmem:[#allocation4 + $0x58] sm:$0xff]
    %v215 = vld [vmem:[#allocation4 + $0x60] sm:$0xff]
    %v216 = vld [vmem:[#allocation4 + $0x68] sm:$0xff]
    %v217 = vld [vmem:[#allocation4 + $0x70] sm:$0xff]
    %v218 = vld [vmem:[#allocation4 + $0x78] sm:$0xff]
    %v219 = vld [vmem:[#allocation4 + $0x80] sm:$0xff]
    %v220 = vld [vmem:[#allocation4 + $0x88] sm:$0xff]
    %v221 = vld [vmem:[#allocation4 + $0x90] sm:$0xff]
    %v222 = vld [vmem:[#allocation4 + $0x98] sm:$0xff]
    %v223 = vld [vmem:[#allocation4 + $0xa0] sm:$0xff]
    %v224 = vld [vmem:[#allocation4 + $0xa8] sm:$0xff]
    %v225 = vld [vmem:[#allocation4 + $0xb0] sm:$0xff]
    %v226 = vld [vmem:[#allocation4 + $0xb8] sm:$0xff]
    %v227 = vld [vmem:[#allocation4 + $0xc0] sm:$0xff]
    %v228 = vld [vmem:[#allocation4 + $0xc8] sm:$0xff]
    %v229 = vld [vmem:[#allocation4 + $0xd0] sm:$0xff]
    %v230 = vld [vmem:[#allocation4 + $0xd8] sm:$0xff]
    %v231 = vld [vmem:[#allocation4 + $0xe0] sm:$0xff]
    %v232 = vld [vmem:[#allocation4 + $0xe8] sm:$0xff]
    %v233 = vld [vmem:[#allocation4 + $0xf0] sm:$0xff]
    %v234 = vld [vmem:[#allocation4 + $0xf8] sm:$0xff]
    %v235 = vld [vmem:[%s4] sm:$0x3]
    %v237 = vlaneseq
    %v238 = vshrl.u32 %v237, 7
    %v239 = vsub.s32 0, %v238
    %v240 = vrot.slane %v235, %v239
    %v241 = vlaneseq
    %v242 = vshrl.u32 %v241, 7
    %v243 = vsub.s32 1, %v242
    %v244 = vrot.slane %v235, %v243
    %v279 = vunpack.c.l.b16 %v203
    %v280 = vunpack.c.h.b16 %v203
    %v281 = vunpack.c.l.b16 %v204
    %v282 = vunpack.c.h.b16 %v204
    %v283 = vunpack.c.l.b16 %v205
    %v284 = vunpack.c.h.b16 %v205
    %v285 = vunpack.c.l.b16 %v206
    %v286 = vunpack.c.h.b16 %v206
    %v287 = vunpack.c.l.b16 %v207
    %v288 = vunpack.c.h.b16 %v207
    %v289 = vunpack.c.l.b16 %v208
    %v290 = vunpack.c.h.b16 %v208
    %v291 = vunpack.c.l.b16 %v209
    %v292 = vunpack.c.h.b16 %v209
    %v293 = vunpack.c.l.b16 %v210
    %v294 = vunpack.c.h.b16 %v210
    %v295 = vunpack.c.l.b16 %v211
    %v296 = vunpack.c.h.b16 %v211
    %v297 = vunpack.c.l.b16 %v212
    %v298 = vunpack.c.h.b16 %v212
    %v299 = vunpack.c.l.b16 %v213
    %v300 = vunpack.c.h.b16 %v213
    %v301 = vunpack.c.l.b16 %v214
    %v302 = vunpack.c.h.b16 %v214
    %v303 = vunpack.c.l.b16 %v215
    %v304 = vunpack.c.h.b16 %v215
    %v305 = vunpack.c.l.b16 %v216
    %v306 = vunpack.c.h.b16 %v216
    %v307 = vunpack.c.l.b16 %v217
    %v308 = vunpack.c.h.b16 %v217
    %v309 = vunpack.c.l.b16 %v218
    %v310 = vunpack.c.h.b16 %v218
    %v311 = vunpack.c.l.b16 %v219
    %v312 = vunpack.c.h.b16 %v219
    %v313 = vunpack.c.l.b16 %v220
    %v314 = vunpack.c.h.b16 %v220
    %v315 = vunpack.c.l.b16 %v221
    %v316 = vunpack.c.h.b16 %v221
    %v317 = vunpack.c.l.b16 %v222
    %v318 = vunpack.c.h.b16 %v222
    %v319 = vunpack.c.l.b16 %v223
    %v320 = vunpack.c.h.b16 %v223
    %v321 = vunpack.c.l.b16 %v224
    %v322 = vunpack.c.h.b16 %v224
    %v323 = vunpack.c.l.b16 %v225
    %v324 = vunpack.c.h.b16 %v225
    %v325 = vunpack.c.l.b16 %v226
    %v326 = vunpack.c.h.b16 %v226
    %v327 = vunpack.c.l.b16 %v227
    %v328 = vunpack.c.h.b16 %v227
    %v329 = vunpack.c.l.b16 %v228
    %v330 = vunpack.c.h.b16 %v228
    %v331 = vunpack.c.l.b16 %v229
    %v332 = vunpack.c.h.b16 %v229
    %v333 = vunpack.c.l.b16 %v230
    %v334 = vunpack.c.h.b16 %v230
    %v335 = vunpack.c.l.b16 %v231
    %v336 = vunpack.c.h.b16 %v231
    %v337 = vunpack.c.l.b16 %v232
    %v338 = vunpack.c.h.b16 %v232
    %v339 = vunpack.c.l.b16 %v233
    %v340 = vunpack.c.h.b16 %v233
    %v341 = vunpack.c.l.b16 %v234
    %v342 = vunpack.c.h.b16 %v234
    %v343 = vpack.c.b16 %v281, %v279
    %v344 = vpack.c.b16 %v282, %v280
    %v345 = vpack.c.b16 %v285, %v283
    %v346 = vpack.c.b16 %v286, %v284
    %v347 = vpack.c.b16 %v289, %v287
    %v348 = vpack.c.b16 %v290, %v288
    %v349 = vpack.c.b16 %v293, %v291
    %v350 = vpack.c.b16 %v294, %v292
    %v351 = vpack.c.b16 %v297, %v295
    %v352 = vpack.c.b16 %v298, %v296
    %v353 = vpack.c.b16 %v301, %v299
    %v354 = vpack.c.b16 %v302, %v300
    %v355 = vpack.c.b16 %v305, %v303
    %v356 = vpack.c.b16 %v306, %v304
    %v357 = vpack.c.b16 %v309, %v307
    %v358 = vpack.c.b16 %v310, %v308
    %v359 = vpack.c.b16 %v313, %v311
    %v360 = vpack.c.b16 %v314, %v312
    %v361 = vpack.c.b16 %v317, %v315
    %v362 = vpack.c.b16 %v318, %v316
    %v363 = vpack.c.b16 %v321, %v319
    %v364 = vpack.c.b16 %v322, %v320
    %v365 = vpack.c.b16 %v325, %v323
    %v366 = vpack.c.b16 %v326, %v324
    %v367 = vpack.c.b16 %v329, %v327
    %v368 = vpack.c.b16 %v330, %v328
    %v369 = vpack.c.b16 %v333, %v331
    %v370 = vpack.c.b16 %v334, %v332
    %v371 = vpack.c.b16 %v337, %v335
    %v372 = vpack.c.b16 %v338, %v336
    %v373 = vpack.c.b16 %v341, %v339
    %v374 = vpack.c.b16 %v342, %v340
    %407 = vmatprep.subr.bf16.mxu0 %v344
    %408 = vmatpush1.bf16.msra.mxu0 %v343
    %409 = vmatprep.subr.bf16.mxu0 %v346
    %410 = vmatpush1.bf16.msra.mxu0 %v345
    %411 = vmatprep.subr.bf16.mxu0 %v348
    %412 = vmatpush1.bf16.msra.mxu0 %v347
    %413 = vmatprep.subr.bf16.mxu0 %v350
    %414 = vmatpush1.bf16.msra.mxu0 %v349
    %415 = vmatprep.subr.bf16.mxu0 %v352
    %416 = vmatpush1.bf16.msra.mxu0 %v351
    %417 = vmatprep.subr.bf16.mxu0 %v354
    %418 = vmatpush1.bf16.msra.mxu0 %v353
    %419 = vmatprep.subr.bf16.mxu0 %v356
    %420 = vmatpush1.bf16.msra.mxu0 %v355
    %421 = vmatprep.subr.bf16.mxu0 %v358
    %422 = vmatpush1.bf16.msra.mxu0 %v357
    %423 = vmatprep.subr.bf16.mxu0 %v360
    %424 = vmatpush1.bf16.msra.mxu0 %v359
    %425 = vmatprep.subr.bf16.mxu0 %v362
    %426 = vmatpush1.bf16.msra.mxu0 %v361
    %427 = vmatprep.subr.bf16.mxu0 %v364
    %428 = vmatpush1.bf16.msra.mxu0 %v363
    %429 = vmatprep.subr.bf16.mxu0 %v366
    %430 = vmatpush1.bf16.msra.mxu0 %v365
    %431 = vmatprep.subr.bf16.mxu0 %v368
    %432 = vmatpush1.bf16.msra.mxu0 %v367
    %433 = vmatprep.subr.bf16.mxu0 %v370
    %434 = vmatpush1.bf16.msra.mxu0 %v369
    %435 = vmatprep.subr.bf16.mxu0 %v372
    %436 = vmatpush1.bf16.msra.mxu0 %v371
    %437 = vmatprep.subr.bf16.mxu0 %v374
    %438 = vmatpush1.bf16.msra.mxu0 %v373
    %439 = vmatprep.mubr.bf16.mxu0 %v202
    %440 = vmatmul.mubr.bf16.gmra.mrb[0].mxu0 %v201
    %v441 = vpop.f32.mrb[0].mxu0
    %v442 = vadd.f32 %v240, %v441
    %v443 = vpop.f32.mrb[0].mxu0
    %v444 = vadd.f32 %v244, %v443
    %v445 = vpop.f32.mrb[0].mxu0
    %v446 = vpop.f32.mrb[0].mxu0
    %447 = vdwg.mxu0
    %v448 = vmax.f32 %v442, 0.0
    %v449 = vmax.f32 %v444, 0.0
    %v450 = vpack.c.bf16 %v448, %v448
    %v451 = vpack.c.bf16 %v449, %v449
    %v452 = vld [vmem:[#allocation6] sm:$0xf]
    %v453 = vld [vmem:[#allocation6 + $0x4] sm:$0xf]
    %v454 = vld [vmem:[#allocation6 + $0x8] sm:$0xf]
    %v455 = vld [vmem:[#allocation6 + $0xc] sm:$0xf]
    %v456 = vld [vmem:[#allocation6 + $0x10] sm:$0xf]
    %v457 = vld [vmem:[#allocation6 + $0x14] sm:$0xf]
    %v458 = vld [vmem:[#allocation6 + $0x18] sm:$0xf]
    %v459 = vld [vmem:[#allocation6 + $0x1c] sm:$0xf]
    %v460 = vld [vmem:[#allocation6 + $0x20] sm:$0xf]
    %v461 = vld [vmem:[#allocation6 + $0x24] sm:$0xf]
    %v462 = vld [vmem:[#allocation6 + $0x28] sm:$0xf]
    %v463 = vld [vmem:[#allocation6 + $0x2c] sm:$0xf]
    %v464 = vld [vmem:[#allocation6 + $0x30] sm:$0xf]
    %v465 = vld [vmem:[#allocation6 + $0x34] sm:$0xf]
    %v466 = vld [vmem:[#allocation6 + $0x38] sm:$0xf]
    %v467 = vld [vmem:[#allocation6 + $0x3c] sm:$0xf]
    %v468 = vld [vmem:[#allocation6 + $0x40] sm:$0xf]
    %v469 = vld [vmem:[#allocation6 + $0x44] sm:$0xf]
    %v470 = vld [vmem:[#allocation6 + $0x48] sm:$0xf]
    %v471 = vld [vmem:[#allocation6 + $0x4c] sm:$0xf]
    %v472 = vld [vmem:[#allocation6 + $0x50] sm:$0xf]
    %v473 = vld [vmem:[#allocation6 + $0x54] sm:$0xf]
    %v474 = vld [vmem:[#allocation6 + $0x58] sm:$0xf]
    %v475 = vld [vmem:[#allocation6 + $0x5c] sm:$0xf]
    %v476 = vld [vmem:[#allocation6 + $0x60] sm:$0xf]
    %v477 = vld [vmem:[#allocation6 + $0x64] sm:$0xf]
    %v478 = vld [vmem:[#allocation6 + $0x68] sm:$0xf]
    %v479 = vld [vmem:[#allocation6 + $0x6c] sm:$0xf]
    %v480 = vld [vmem:[#allocation6 + $0x70] sm:$0xf]
    %v481 = vld [vmem:[#allocation6 + $0x74] sm:$0xf]
    %v482 = vld [vmem:[#allocation6 + $0x78] sm:$0xf]
    %v483 = vld [vmem:[#allocation6 + $0x7c] sm:$0xf]
    %v484 = vld [vmem:[%s6] sm:$0x1]
    %v486 = vlaneseq
    %v487 = vshrl.u32 %v486, 7
    %v488 = vsub.s32 0, %v487
    %v489 = vrot.slane %v484, %v488
    %v523 = vunpack.c.l.b16 %v452
    %v524 = vunpack.c.l.b16 %v453
    %v525 = vunpack.c.l.b16 %v454
    %v526 = vunpack.c.l.b16 %v455
    %v527 = vunpack.c.l.b16 %v456
    %v528 = vunpack.c.l.b16 %v457
    %v529 = vunpack.c.l.b16 %v458
    %v530 = vunpack.c.l.b16 %v459
    %v531 = vunpack.c.l.b16 %v460
    %v532 = vunpack.c.l.b16 %v461
    %v533 = vunpack.c.l.b16 %v462
    %v534 = vunpack.c.l.b16 %v463
    %v535 = vunpack.c.l.b16 %v464
    %v536 = vunpack.c.l.b16 %v465
    %v537 = vunpack.c.l.b16 %v466
    %v538 = vunpack.c.l.b16 %v467
    %v539 = vunpack.c.l.b16 %v468
    %v540 = vunpack.c.l.b16 %v469
    %v541 = vunpack.c.l.b16 %v470
    %v542 = vunpack.c.l.b16 %v471
    %v543 = vunpack.c.l.b16 %v472
    %v544 = vunpack.c.l.b16 %v473
    %v545 = vunpack.c.l.b16 %v474
    %v546 = vunpack.c.l.b16 %v475
    %v547 = vunpack.c.l.b16 %v476
    %v548 = vunpack.c.l.b16 %v477
    %v549 = vunpack.c.l.b16 %v478
    %v550 = vunpack.c.l.b16 %v479
    %v551 = vunpack.c.l.b16 %v480
    %v552 = vunpack.c.l.b16 %v481
    %v553 = vunpack.c.l.b16 %v482
    %v554 = vunpack.c.l.b16 %v483
    %v555 = vpack.c.b16 %v524, %v523
    %v556 = vpack.c.b16 %v526, %v525
    %v557 = vpack.c.b16 %v528, %v527
    %v558 = vpack.c.b16 %v530, %v529
    %v559 = vpack.c.b16 %v532, %v531
    %v560 = vpack.c.b16 %v534, %v533
    %v561 = vpack.c.b16 %v536, %v535
    %v562 = vpack.c.b16 %v538, %v537
    %v563 = vpack.c.b16 %v540, %v539
    %v564 = vpack.c.b16 %v542, %v541
    %v565 = vpack.c.b16 %v544, %v543
    %v566 = vpack.c.b16 %v546, %v545
    %v567 = vpack.c.b16 %v548, %v547
    %v568 = vpack.c.b16 %v550, %v549
    %v569 = vpack.c.b16 %v552, %v551
    %v570 = vpack.c.b16 %v554, %v553
    %587 = vmatprep.subr.bf16.mxu0 0
    %588 = vmatpush1.bf16.msra.mxu0 %v555
    %589 = vmatprep.subr.bf16.mxu0 0
    %590 = vmatpush1.bf16.msra.mxu0 %v556
    %591 = vmatprep.subr.bf16.mxu0 0
    %592 = vmatpush1.bf16.msra.mxu0 %v557
    %593 = vmatprep.subr.bf16.mxu0 0
    %594 = vmatpush1.bf16.msra.mxu0 %v558
    %595 = vmatprep.subr.bf16.mxu0 0
    %596 = vmatpush1.bf16.msra.mxu0 %v559
    %597 = vmatprep.subr.bf16.mxu0 0
    %598 = vmatpush1.bf16.msra.mxu0 %v560
    %599 = vmatprep.subr.bf16.mxu0 0
    %600 = vmatpush1.bf16.msra.mxu0 %v561
    %601 = vmatprep.subr.bf16.mxu0 0
    %602 = vmatpush1.bf16.msra.mxu0 %v562
    %603 = vmatprep.subr.bf16.mxu0 0
    %604 = vmatpush1.bf16.msra.mxu0 %v563
    %605 = vmatprep.subr.bf16.mxu0 0
    %606 = vmatpush1.bf16.msra.mxu0 %v564
    %607 = vmatprep.subr.bf16.mxu0 0
    %608 = vmatpush1.bf16.msra.mxu0 %v565
    %609 = vmatprep.subr.bf16.mxu0 0
    %610 = vmatpush1.bf16.msra.mxu0 %v566
    %611 = vmatprep.subr.bf16.mxu0 0
    %612 = vmatpush1.bf16.msra.mxu0 %v567
    %613 = vmatprep.subr.bf16.mxu0 0
    %614 = vmatpush1.bf16.msra.mxu0 %v568
    %615 = vmatprep.subr.bf16.mxu0 0
    %616 = vmatpush1.bf16.msra.mxu0 %v569
    %617 = vmatprep.subr.bf16.mxu0 0
    %618 = vmatpush1.bf16.msra.mxu0 %v570
    %619 = vmatprep.mubr.bf16.mxu0 %v451
    %620 = vmatmul.mubr.bf16.gmra.mrb[0].mxu0 %v450
    %v621 = vpop.f32.mrb[0].mxu0
    %v622 = vadd.f32 %v489, %v621
    %v623 = vpop.f32.mrb[0].mxu0
    %v624 = vpop.f32.mrb[0].mxu0
    %v625 = vpop.f32.mrb[0].mxu0
    %626 = vdwg.mxu0
    %v627 = vtanh.pop %v622
    %628 = vst [vmem:[%s7] sm:$0xff] %v627
    // Predicated region
    $region42: #{ddpg_actor_forward.1} parent=1 // pred_check
      _
    $region43: #{ddpg_actor_forward.1} parent=1 // pred_check_branch
      %630 = sbr.rel (0) target = $region45
    $region44: #{ddpg_actor_forward.1} parent=1 // pred_region
      _
    $region45: #{ddpg_actor_forward.1} parent=1 // pred_fallthru
      _
    // Predicated region
    $region46: #{ddpg_actor_forward.1} parent=1 // pred_check
      _
    $region47: #{ddpg_actor_forward.1} parent=1 // pred_check_branch
      %632 = sbr.rel (0) target = $region49
    $region48: #{ddpg_actor_forward.1} parent=1 // pred_region
      _
    $region49: #{ddpg_actor_forward.1} parent=1 // pred_fallthru
      _
    %633 = vsyncpa [#allocation3], 1
    %634 = vsyncpa [#allocation5], 1

</llo_original>
